<compile_context>
chip_gen: v5e
topology: v5e:2x2
jax: 0.10.0
libtpu: 0.0.40
codegen_flags: <defaults>
</compile_context>

<pallas_src>
import functools

import jax
import jax.numpy as jnp
from jax import lax
from jax.experimental import pallas as pl
from jax.experimental.pallas import tpu as pltpu


def make_attention_kernel(group_size, head_dim, compute_dtype):
    """One grid step == one (batch, head-group) pair."""
    G, hd = group_size, head_dim
    GD = G * hd
    exact_div = jnp.dtype(compute_dtype) == jnp.float32

    def kernel(x_ref, wqkv_ref, wp_ref, b_ref, o_ref, acc_ref):
        g = pl.program_id(1)

        @pl.when(g == 0)
        def _init():
            acc_ref[...] = jnp.zeros_like(acc_ref)

        x = x_ref[0]            # (N, C)        compute_dtype
        w_qkv = wqkv_ref[g]     # (C, 3*G*hd)   compute_dtype (scale pre-folded in Q cols)
        wp = wp_ref[g]          # (G*hd, C)     rows of proj^T for this head group

        # Fused Q/K/V projection for the whole head group: ONE wide MXU matmul
        # (output width 3*G*hd), f32 accumulation.
        qkv = jnp.dot(x, w_qkv, preferred_element_type=jnp.float32)   # (N, 3*GD) f32
        qkv = qkv.astype(compute_dtype)
        q = qkv[:, 0 * GD:1 * GD]          # static lane slices
        k = qkv[:, 1 * GD:2 * GD]
        v = qkv[:, 2 * GD:3 * GD]

        # Per-head attention within the group (scores are inherently hd-wide;
        # G is small and statically bounded by the MXU width / VMEM budget).
        head_outs = []
        for h in range(G):
            q_h = q[:, h * hd:(h + 1) * hd]
            k_h = k[:, h * hd:(h + 1) * hd]
            v_h = v[:, h * hd:(h + 1) * hd]

            # scores = (q * scale) @ k^T -- scale already folded into Wq.
            s = lax.dot_general(q_h, k_h, (((1,), (1,)), ((), ())),
                                preferred_element_type=jnp.float32)   # (N, N) f32

            # Numerically stable softmax with DEFERRED normalisation (f32).
            m = jnp.max(s, axis=-1, keepdims=True)
            p = jnp.exp(s - m)                                        # (N, N) f32
            denom = jnp.sum(p, axis=-1, keepdims=True)                # (N, 1) f32

            o_h = jnp.dot(p.astype(compute_dtype), v_h,
                          preferred_element_type=jnp.float32)         # (N, hd) f32
            if exact_div:
                o_h = o_h / denom
            else:
                o_h = o_h * pl.reciprocal(denom, approx=True)
            head_outs.append(o_h.astype(compute_dtype))

        o_g = head_outs[0] if G == 1 else jnp.concatenate(head_outs, axis=-1)  # (N, GD)

        # One output-projection matmul per group (contraction dim G*hd) folded
        # straight into the f32 accumulator -- one RMW pass per group.
        acc_ref[...] += jnp.dot(o_g, wp, preferred_element_type=jnp.float32)    # (N, C) f32

        @pl.when(g == pl.num_programs(1) - 1)
        def _finalize():
            o_ref[0] = (acc_ref[...] + b_ref[...]).astype(o_ref.dtype)

    return kernel


@functools.partial(jax.jit, static_argnames=("num_heads", "compute_dtype"))
def attention_forward(x, wqkv, wproj, bproj, *, num_heads,
                      compute_dtype=jnp.bfloat16):
    """x: (B, N, C); wqkv: (3C, C); wproj: (C, C); bproj: (C,)."""
    B, N, C = x.shape
    head_dim = C // num_heads
    scale = head_dim ** -0.5
    cdt = jnp.dtype(compute_dtype)

    # ---- head-group size: fill the MXU lane width (256 on v6e/v7x) --------
    G = max(1, min(num_heads, 256 // max(head_dim, 1)))
    while num_heads % G:
        G -= 1
    num_groups = num_heads // G
    GD = G * head_dim

    # ---- trace-time weight reorganisation (free) ---------------------------
    # nn.Linear qkv weight rows are output features: row (t*C + h*hd + d).
    wq = wqkv[:C].reshape(num_heads, head_dim, C)          # (H, hd, C)
    wk = wqkv[C:2 * C].reshape(num_heads, head_dim, C)
    wv = wqkv[2 * C:].reshape(num_heads, head_dim, C)

    def group_cols(w):  # (H, hd, C) -> (num_groups, C, G*hd), head-major columns
        return (w.reshape(num_groups, G, head_dim, C)
                 .transpose(0, 3, 1, 2)
                 .reshape(num_groups, C, GD))

    wq_g = group_cols(wq * scale)                          # scale folded into Q
    wk_g = group_cols(wk)
    wv_g = group_cols(wv)
    # Fused per-group QKV weight: one wide matmul, q/k/v at static lane offsets.
    wqkv_grp = jnp.concatenate([wq_g, wk_g, wv_g], axis=-1).astype(cdt)  # (nG, C, 3*GD)
    # proj: y = out @ wproj.T ; head group g contributes rows [g*GD:(g+1)*GD] of wproj.T
    wp_grp = wproj.T.reshape(num_groups, GD, C).astype(cdt)              # (nG, GD, C)
    bproj2 = bproj.reshape(1, C).astype(jnp.float32)
    x_c = x.astype(cdt)

    kernel = make_attention_kernel(G, head_dim, cdt)

    # ---- explicit VMEM budget ----------------------------------------------
    needed = 0
    needed += 2 * (wqkv_grp.size + wp_grp.size) * cdt.itemsize   # resident weights (2x: pipeline bufs)
    needed += 2 * N * C * cdt.itemsize                           # x block (double-buffered)
    needed += 2 * N * C * x.dtype.itemsize                       # out block (double-buffered)
    needed += N * C * 4                                          # f32 proj accumulator
    needed += N * 3 * GD * (4 + cdt.itemsize)                    # fused qkv (f32 + compute copy)
    needed += G * N * N * 4                                      # live per-head f32 score matrices
    needed += N * GD * (4 + cdt.itemsize)                        # per-group head outputs
    try:
        phys_vmem = int(pltpu.get_tpu_info().vmem_capacity_bytes)
    except Exception:
        phys_vmem = 64 * 2 ** 20                                 # conservative: v7x per-TC VMEM
    vmem_limit = int(min(max(needed * 1.25, 32 * 2 ** 20), 0.8 * phys_vmem))

    # ---- advisory cost estimate (weights now stream from HBM exactly once) --
    flops = int(2 * B * N * C * (3 * C)                       # fused QKV projection
                + 2 * B * num_heads * N * N * head_dim * 2    # QK^T and P@V
                + 2 * B * N * C * C)                          # output projection
    transcendentals = int(B * num_heads * N * N)              # exp
    bytes_accessed = int((wqkv_grp.size + wp_grp.size + bproj2.size) * cdt.itemsize
                         + x_c.size * cdt.itemsize
                         + B * N * C * x.dtype.itemsize)

    return pl.pallas_call(
        kernel,
        out_shape=jax.ShapeDtypeStruct((B, N, C), x.dtype),
        grid=(B, num_groups),
        in_specs=[
            # x: one (N, C) slab per batch element; constant across the group axis.
            pl.BlockSpec((1, N, C), lambda b, g: (b, 0, 0)),
            # Weights: FULL blocks with constant index_map -> VMEM-resident for
            # the whole kernel (one DMA, pure revisits); indexed by `g` in-body.
            pl.BlockSpec((num_groups, C, 3 * GD), lambda b, g: (0, 0, 0)),
            pl.BlockSpec((num_groups, GD, C), lambda b, g: (0, 0, 0)),
            pl.BlockSpec((1, C), lambda b, g: (0, 0)),                 # proj bias
        ],
        out_specs=pl.BlockSpec((1, N, C), lambda b, g: (b, 0, 0)),
        scratch_shapes=[pltpu.VMEM((N, C), jnp.float32)],              # proj accumulator
        compiler_params=pltpu.CompilerParams(
            dimension_semantics=("parallel", "arbitrary"),
            vmem_limit_bytes=vmem_limit),
        cost_estimate=pl.CostEstimate(flops=flops,
                                      transcendentals=transcendentals,
                                      bytes_accessed=bytes_accessed),
    )(x_c, wqkv_grp, wp_grp, bproj2)


def attention_reference(x, wqkv, wproj, bproj, num_heads):
    """Pure-JAX reference with exactly the PyTorch module's math (f32)."""
    B, N, C = x.shape
    head_dim = C // num_heads
    scale = head_dim ** -0.5
    qkv = jnp.einsum("bnc,oc->bno", x, wqkv)                  # (B, N, 3C)
    qkv = qkv.reshape(B, N, 3, num_heads, head_dim).transpose(2, 0, 3, 1, 4)
    q, k, v = qkv[0], qkv[1], qkv[2]                          # (B, H, N, hd)
    attn = jnp.einsum("bhnd,bhmd->bhnm", q, k) * scale
    attn = jax.nn.softmax(attn, axis=-1)
    out = jnp.einsum("bhnm,bhmd->bhnd", attn, v)              # (B, H, N, hd)
    out = out.transpose(0, 2, 1, 3).reshape(B, N, C)
    return jnp.einsum("bnc,oc->bno", out, wproj) + bproj


if __name__ == "__main__":
    B, N, C = 2, 8, 32
    num_heads = 8

    key = jax.random.PRNGKey(0)
    kx, kq, kp, kb = jax.random.split(key, 4)

    # Deterministic synthetic parameters (nn.Linear weight shapes).
    x = jax.random.normal(kx, (B, N, C), dtype=jnp.float32)
    wqkv = jax.random.normal(kq, (3 * C, C), dtype=jnp.float32) * 0.1   # qkv_bias=False
    wproj = jax.random.normal(kp, (C, C), dtype=jnp.float32) * 0.1
    bproj = jax.random.normal(kb, (C,), dtype=jnp.float32) * 0.1

    ref = attention_reference(x, wqkv, wproj, bproj, num_heads)

    # f32 path: tight check against the reference (exact divide, no approx).
    out_f32 = attention_forward(x, wqkv, wproj, bproj,
                                num_heads=num_heads, compute_dtype=jnp.float32)
    out_f32 = jax.block_until_ready(out_f32)
    assert out_f32.shape == (B, N, C)
    assert jnp.allclose(out_f32, ref, atol=2e-3, rtol=2e-3), "f32 mismatch vs reference"

    # bf16 fast path (default): looser tolerance for bf16 matmuls.
    out_bf16 = attention_forward(x, wqkv, wproj, bproj,
                                 num_heads=num_heads, compute_dtype=jnp.bfloat16)
    out_bf16 = jax.block_until_ready(out_bf16)
    assert out_bf16.shape == (B, N, C)
    assert jnp.allclose(out_bf16, ref, atol=5e-2, rtol=5e-2), "bf16 mismatch vs reference"

    print("KERNEL_OK")
</pallas_src>

<mosaic_0001>
module attributes {stable_mosaic.version = 11 : i64} {
  func.func @kernel(%arg0: i32, %arg1: i32, %arg2: memref<1x8x32xf32, #tpu.memory_space<vmem>>, %arg3: memref<1x32x96xf32, #tpu.memory_space<vmem>>, %arg4: memref<1x32x32xf32, #tpu.memory_space<vmem>>, %arg5: memref<1x32xf32, #tpu.memory_space<vmem>>, %arg6: memref<1x8x32xf32, #tpu.memory_space<vmem>>, %arg7: memref<8x32xf32, #tpu.memory_space<vmem>>) attributes {dimension_semantics = [#tpu.dimension_semantics<parallel>, #tpu.dimension_semantics<arbitrary>], iteration_bounds = array<i64: 2, 1>, scalar_prefetch = 0 : i64, scratch_operands = 1 : i64, tpu.core_type = #tpu.core_type<tc>, window_params = [{transform_indices = @transform_0, window_bounds = array<i64: 1, 8, 32>}, {pipeline_mode = #tpu.pipeline_mode<synchronous>, transform_indices = @transform_1, window_bounds = array<i64: 1, 32, 96>}, {pipeline_mode = #tpu.pipeline_mode<synchronous>, transform_indices = @transform_2, window_bounds = array<i64: 1, 32, 32>}, {pipeline_mode = #tpu.pipeline_mode<synchronous>, transform_indices = @transform_3, window_bounds = array<i64: 1, 32>}, {transform_indices = @transform_4, window_bounds = array<i64: 1, 8, 32>}]} {
    %c0_i32 = arith.constant 0 : i32
    %0 = arith.cmpi eq, %arg1, %c0_i32 : i32
    %1 = arith.extui %0 : i1 to i32
    %c0_i32_0 = arith.constant 0 : i32
    %2 = arith.cmpi ne, %1, %c0_i32_0 : i32
    scf.if %2 {
      %cst_46 = arith.constant 0.000000e+00 : f32
      %135 = vector.broadcast %cst_46 : f32 to vector<8x32xf32>
      %c0_47 = arith.constant 0 : index
      %c0_48 = arith.constant 0 : index
      %136 = vector.load %arg7[%c0_47, %c0_48] : memref<8x32xf32, #tpu.memory_space<vmem>>, vector<8x32xf32>
      tpu.vector_store %arg7[%c0_47, %c0_48], %135 {strides = array<i32>} : memref<8x32xf32, #tpu.memory_space<vmem>>, vector<8x32xf32>,
    } else {
    }
    %c0 = arith.constant 0 : index
    %c0_1 = arith.constant 0 : index
    %c0_2 = arith.constant 0 : index
    %3 = vector.load %arg2[%c0, %c0_1, %c0_2] : memref<1x8x32xf32, #tpu.memory_space<vmem>>, vector<1x8x32xf32>
    %4 = vector.shape_cast %3 : vector<1x8x32xf32> to vector<8x32xf32>
    %5 = arith.index_cast %arg1 : i32 to index
    %c0_3 = arith.constant 0 : index
    %c0_4 = arith.constant 0 : index
    %6 = vector.load %arg3[%5, %c0_3, %c0_4] : memref<1x32x96xf32, #tpu.memory_space<vmem>>, vector<1x32x96xf32>
    %7 = vector.shape_cast %6 : vector<1x32x96xf32> to vector<32x96xf32>
    %8 = arith.index_cast %arg1 : i32 to index
    %c0_5 = arith.constant 0 : index
    %c0_6 = arith.constant 0 : index
    %9 = vector.load %arg4[%8, %c0_5, %c0_6] : memref<1x32x32xf32, #tpu.memory_space<vmem>>, vector<1x32x32xf32>
    %10 = vector.shape_cast %9 : vector<1x32x32xf32> to vector<32x32xf32>
    %cst = arith.constant dense<0.000000e+00> : vector<8x96xf32>
    %11 = tpu.matmul %4, %7, %cst {dimension_numbers = #tpu.dot_dimension_numbers<[1], [0], [0], [1], [0, 0, 1, 1], [], []>} : vector<8x32xf32>, vector<32x96xf32>, vector<8x96xf32> -> vector<8x96xf32>
    %12 = vector.extract_strided_slice %11 {offsets = [0, 0], sizes = [8, 32], strides = [1, 1]} : vector<8x96xf32> to vector<8x32xf32>
    %13 = vector.extract_strided_slice %11 {offsets = [0, 32], sizes = [8, 32], strides = [1, 1]} : vector<8x96xf32> to vector<8x32xf32>
    %14 = vector.extract_strided_slice %11 {offsets = [0, 64], sizes = [8, 32], strides = [1, 1]} : vector<8x96xf32> to vector<8x32xf32>
    %15 = vector.extract_strided_slice %12 {offsets = [0, 0], sizes = [8, 4], strides = [1, 1]} : vector<8x32xf32> to vector<8x4xf32>
    %16 = vector.extract_strided_slice %13 {offsets = [0, 0], sizes = [8, 4], strides = [1, 1]} : vector<8x32xf32> to vector<8x4xf32>
    %17 = vector.extract_strided_slice %14 {offsets = [0, 0], sizes = [8, 4], strides = [1, 1]} : vector<8x32xf32> to vector<8x4xf32>
    %cst_7 = arith.constant dense<0.000000e+00> : vector<8x8xf32>
    %18 = tpu.matmul %15, %16, %cst_7 {dimension_numbers = #tpu.dot_dimension_numbers<[1], [1], [0], [0], [0, 0, 1, 0], [], []>} : vector<8x4xf32>, vector<8x4xf32>, vector<8x8xf32> -> vector<8x8xf32>
    %cst_8 = arith.constant dense<0xFF800000> : vector<8xf32>
    %19 = vector.multi_reduction <maximumf>, %18, %cst_8 [1] : vector<8x8xf32> to vector<8xf32>
    %20 = vector.shape_cast %19 : vector<8xf32> to vector<8x1xf32>
    %21 = vector.broadcast %20 : vector<8x1xf32> to vector<8x8xf32>
    %22 = arith.subf %18, %21 : vector<8x8xf32>
    %23 = math.exp %22 : vector<8x8xf32>
    %cst_9 = arith.constant dense<0.000000e+00> : vector<8xf32>
    %24 = vector.multi_reduction <add>, %23, %cst_9 [1] : vector<8x8xf32> to vector<8xf32>
    %25 = vector.shape_cast %24 : vector<8xf32> to vector<8x1xf32>
    %cst_10 = arith.constant dense<0.000000e+00> : vector<8x4xf32>
    %26 = tpu.matmul %23, %17, %cst_10 {dimension_numbers = #tpu.dot_dimension_numbers<[1], [0], [0], [1], [0, 0, 1, 1], [], []>} : vector<8x8xf32>, vector<8x4xf32>, vector<8x4xf32> -> vector<8x4xf32>
    %27 = vector.broadcast %25 : vector<8x1xf32> to vector<8x4xf32>
    %28 = arith.divf %26, %27 : vector<8x4xf32>
    %29 = vector.extract_strided_slice %12 {offsets = [0, 4], sizes = [8, 4], strides = [1, 1]} : vector<8x32xf32> to vector<8x4xf32>
    %30 = vector.extract_strided_slice %13 {offsets = [0, 4], sizes = [8, 4], strides = [1, 1]} : vector<8x32xf32> to vector<8x4xf32>
    %31 = vector.extract_strided_slice %14 {offsets = [0, 4], sizes = [8, 4], strides = [1, 1]} : vector<8x32xf32> to vector<8x4xf32>
    %cst_11 = arith.constant dense<0.000000e+00> : vector<8x8xf32>
    %32 = tpu.matmul %29, %30, %cst_11 {dimension_numbers = #tpu.dot_dimension_numbers<[1], [1], [0], [0], [0, 0, 1, 0], [], []>} : vector<8x4xf32>, vector<8x4xf32>, vector<8x8xf32> -> vector<8x8xf32>
    %cst_12 = arith.constant dense<0xFF800000> : vector<8xf32>
    %33 = vector.multi_reduction <maximumf>, %32, %cst_12 [1] : vector<8x8xf32> to vector<8xf32>
    %34 = vector.shape_cast %33 : vector<8xf32> to vector<8x1xf32>
    %35 = vector.broadcast %34 : vector<8x1xf32> to vector<8x8xf32>
    %36 = arith.subf %32, %35 : vector<8x8xf32>
    %37 = math.exp %36 : vector<8x8xf32>
    %cst_13 = arith.constant dense<0.000000e+00> : vector<8xf32>
    %38 = vector.multi_reduction <add>, %37, %cst_13 [1] : vector<8x8xf32> to vector<8xf32>
    %39 = vector.shape_cast %38 : vector<8xf32> to vector<8x1xf32>
    %cst_14 = arith.constant dense<0.000000e+00> : vector<8x4xf32>
    %40 = tpu.matmul %37, %31, %cst_14 {dimension_numbers = #tpu.dot_dimension_numbers<[1], [0], [0], [1], [0, 0, 1, 1], [], []>} : vector<8x8xf32>, vector<8x4xf32>, vector<8x4xf32> -> vector<8x4xf32>
    %41 = vector.broadcast %39 : vector<8x1xf32> to vector<8x4xf32>
    %42 = arith.divf %40, %41 : vector<8x4xf32>
    %43 = vector.extract_strided_slice %12 {offsets = [0, 8], sizes = [8, 4], strides = [1, 1]} : vector<8x32xf32> to vector<8x4xf32>
    %44 = vector.extract_strided_slice %13 {offsets = [0, 8], sizes = [8, 4], strides = [1, 1]} : vector<8x32xf32> to vector<8x4xf32>
    %45 = vector.extract_strided_slice %14 {offsets = [0, 8], sizes = [8, 4], strides = [1, 1]} : vector<8x32xf32> to vector<8x4xf32>
    %cst_15 = arith.constant dense<0.000000e+00> : vector<8x8xf32>
    %46 = tpu.matmul %43, %44, %cst_15 {dimension_numbers = #tpu.dot_dimension_numbers<[1], [1], [0], [0], [0, 0, 1, 0], [], []>} : vector<8x4xf32>, vector<8x4xf32>, vector<8x8xf32> -> vector<8x8xf32>
    %cst_16 = arith.constant dense<0xFF800000> : vector<8xf32>
    %47 = vector.multi_reduction <maximumf>, %46, %cst_16 [1] : vector<8x8xf32> to vector<8xf32>
    %48 = vector.shape_cast %47 : vector<8xf32> to vector<8x1xf32>
    %49 = vector.broadcast %48 : vector<8x1xf32> to vector<8x8xf32>
    %50 = arith.subf %46, %49 : vector<8x8xf32>
    %51 = math.exp %50 : vector<8x8xf32>
    %cst_17 = arith.constant dense<0.000000e+00> : vector<8xf32>
    %52 = vector.multi_reduction <add>, %51, %cst_17 [1] : vector<8x8xf32> to vector<8xf32>
    %53 = vector.shape_cast %52 : vector<8xf32> to vector<8x1xf32>
    %cst_18 = arith.constant dense<0.000000e+00> : vector<8x4xf32>
    %54 = tpu.matmul %51, %45, %cst_18 {dimension_numbers = #tpu.dot_dimension_numbers<[1], [0], [0], [1], [0, 0, 1, 1], [], []>} : vector<8x8xf32>, vector<8x4xf32>, vector<8x4xf32> -> vector<8x4xf32>
    %55 = vector.broadcast %53 : vector<8x1xf32> to vector<8x4xf32>
    %56 = arith.divf %54, %55 : vector<8x4xf32>
    %57 = vector.extract_strided_slice %12 {offsets = [0, 12], sizes = [8, 4], strides = [1, 1]} : vector<8x32xf32> to vector<8x4xf32>
    %58 = vector.extract_strided_slice %13 {offsets = [0, 12], sizes = [8, 4], strides = [1, 1]} : vector<8x32xf32> to vector<8x4xf32>
    %59 = vector.extract_strided_slice %14 {offsets = [0, 12], sizes = [8, 4], strides = [1, 1]} : vector<8x32xf32> to vector<8x4xf32>
    %cst_19 = arith.constant dense<0.000000e+00> : vector<8x8xf32>
    %60 = tpu.matmul %57, %58, %cst_19 {dimension_numbers = #tpu.dot_dimension_numbers<[1], [1], [0], [0], [0, 0, 1, 0], [], []>} : vector<8x4xf32>, vector<8x4xf32>, vector<8x8xf32> -> vector<8x8xf32>
    %cst_20 = arith.constant dense<0xFF800000> : vector<8xf32>
    %61 = vector.multi_reduction <maximumf>, %60, %cst_20 [1] : vector<8x8xf32> to vector<8xf32>
    %62 = vector.shape_cast %61 : vector<8xf32> to vector<8x1xf32>
    %63 = vector.broadcast %62 : vector<8x1xf32> to vector<8x8xf32>
    %64 = arith.subf %60, %63 : vector<8x8xf32>
    %65 = math.exp %64 : vector<8x8xf32>
    %cst_21 = arith.constant dense<0.000000e+00> : vector<8xf32>
    %66 = vector.multi_reduction <add>, %65, %cst_21 [1] : vector<8x8xf32> to vector<8xf32>
    %67 = vector.shape_cast %66 : vector<8xf32> to vector<8x1xf32>
    %cst_22 = arith.constant dense<0.000000e+00> : vector<8x4xf32>
    %68 = tpu.matmul %65, %59, %cst_22 {dimension_numbers = #tpu.dot_dimension_numbers<[1], [0], [0], [1], [0, 0, 1, 1], [], []>} : vector<8x8xf32>, vector<8x4xf32>, vector<8x4xf32> -> vector<8x4xf32>
    %69 = vector.broadcast %67 : vector<8x1xf32> to vector<8x4xf32>
    %70 = arith.divf %68, %69 : vector<8x4xf32>
    %71 = vector.extract_strided_slice %12 {offsets = [0, 16], sizes = [8, 4], strides = [1, 1]} : vector<8x32xf32> to vector<8x4xf32>
    %72 = vector.extract_strided_slice %13 {offsets = [0, 16], sizes = [8, 4], strides = [1, 1]} : vector<8x32xf32> to vector<8x4xf32>
    %73 = vector.extract_strided_slice %14 {offsets = [0, 16], sizes = [8, 4], strides = [1, 1]} : vector<8x32xf32> to vector<8x4xf32>
    %cst_23 = arith.constant dense<0.000000e+00> : vector<8x8xf32>
    %74 = tpu.matmul %71, %72, %cst_23 {dimension_numbers = #tpu.dot_dimension_numbers<[1], [1], [0], [0], [0, 0, 1, 0], [], []>} : vector<8x4xf32>, vector<8x4xf32>, vector<8x8xf32> -> vector<8x8xf32>
    %cst_24 = arith.constant dense<0xFF800000> : vector<8xf32>
    %75 = vector.multi_reduction <maximumf>, %74, %cst_24 [1] : vector<8x8xf32> to vector<8xf32>
    %76 = vector.shape_cast %75 : vector<8xf32> to vector<8x1xf32>
    %77 = vector.broadcast %76 : vector<8x1xf32> to vector<8x8xf32>
    %78 = arith.subf %74, %77 : vector<8x8xf32>
    %79 = math.exp %78 : vector<8x8xf32>
    %cst_25 = arith.constant dense<0.000000e+00> : vector<8xf32>
    %80 = vector.multi_reduction <add>, %79, %cst_25 [1] : vector<8x8xf32> to vector<8xf32>
    %81 = vector.shape_cast %80 : vector<8xf32> to vector<8x1xf32>
    %cst_26 = arith.constant dense<0.000000e+00> : vector<8x4xf32>
    %82 = tpu.matmul %79, %73, %cst_26 {dimension_numbers = #tpu.dot_dimension_numbers<[1], [0], [0], [1], [0, 0, 1, 1], [], []>} : vector<8x8xf32>, vector<8x4xf32>, vector<8x4xf32> -> vector<8x4xf32>
    %83 = vector.broadcast %81 : vector<8x1xf32> to vector<8x4xf32>
    %84 = arith.divf %82, %83 : vector<8x4xf32>
    %85 = vector.extract_strided_slice %12 {offsets = [0, 20], sizes = [8, 4], strides = [1, 1]} : vector<8x32xf32> to vector<8x4xf32>
    %86 = vector.extract_strided_slice %13 {offsets = [0, 20], sizes = [8, 4], strides = [1, 1]} : vector<8x32xf32> to vector<8x4xf32>
    %87 = vector.extract_strided_slice %14 {offsets = [0, 20], sizes = [8, 4], strides = [1, 1]} : vector<8x32xf32> to vector<8x4xf32>
    %cst_27 = arith.constant dense<0.000000e+00> : vector<8x8xf32>
    %88 = tpu.matmul %85, %86, %cst_27 {dimension_numbers = #tpu.dot_dimension_numbers<[1], [1], [0], [0], [0, 0, 1, 0], [], []>} : vector<8x4xf32>, vector<8x4xf32>, vector<8x8xf32> -> vector<8x8xf32>
    %cst_28 = arith.constant dense<0xFF800000> : vector<8xf32>
    %89 = vector.multi_reduction <maximumf>, %88, %cst_28 [1] : vector<8x8xf32> to vector<8xf32>
    %90 = vector.shape_cast %89 : vector<8xf32> to vector<8x1xf32>
    %91 = vector.broadcast %90 : vector<8x1xf32> to vector<8x8xf32>
    %92 = arith.subf %88, %91 : vector<8x8xf32>
    %93 = math.exp %92 : vector<8x8xf32>
    %cst_29 = arith.constant dense<0.000000e+00> : vector<8xf32>
    %94 = vector.multi_reduction <add>, %93, %cst_29 [1] : vector<8x8xf32> to vector<8xf32>
    %95 = vector.shape_cast %94 : vector<8xf32> to vector<8x1xf32>
    %cst_30 = arith.constant dense<0.000000e+00> : vector<8x4xf32>
    %96 = tpu.matmul %93, %87, %cst_30 {dimension_numbers = #tpu.dot_dimension_numbers<[1], [0], [0], [1], [0, 0, 1, 1], [], []>} : vector<8x8xf32>, vector<8x4xf32>, vector<8x4xf32> -> vector<8x4xf32>
    %97 = vector.broadcast %95 : vector<8x1xf32> to vector<8x4xf32>
    %98 = arith.divf %96, %97 : vector<8x4xf32>
    %99 = vector.extract_strided_slice %12 {offsets = [0, 24], sizes = [8, 4], strides = [1, 1]} : vector<8x32xf32> to vector<8x4xf32>
    %100 = vector.extract_strided_slice %13 {offsets = [0, 24], sizes = [8, 4], strides = [1, 1]} : vector<8x32xf32> to vector<8x4xf32>
    %101 = vector.extract_strided_slice %14 {offsets = [0, 24], sizes = [8, 4], strides = [1, 1]} : vector<8x32xf32> to vector<8x4xf32>
    %cst_31 = arith.constant dense<0.000000e+00> : vector<8x8xf32>
    %102 = tpu.matmul %99, %100, %cst_31 {dimension_numbers = #tpu.dot_dimension_numbers<[1], [1], [0], [0], [0, 0, 1, 0], [], []>} : vector<8x4xf32>, vector<8x4xf32>, vector<8x8xf32> -> vector<8x8xf32>
    %cst_32 = arith.constant dense<0xFF800000> : vector<8xf32>
    %103 = vector.multi_reduction <maximumf>, %102, %cst_32 [1] : vector<8x8xf32> to vector<8xf32>
    %104 = vector.shape_cast %103 : vector<8xf32> to vector<8x1xf32>
    %105 = vector.broadcast %104 : vector<8x1xf32> to vector<8x8xf32>
    %106 = arith.subf %102, %105 : vector<8x8xf32>
    %107 = math.exp %106 : vector<8x8xf32>
    %cst_33 = arith.constant dense<0.000000e+00> : vector<8xf32>
    %108 = vector.multi_reduction <add>, %107, %cst_33 [1] : vector<8x8xf32> to vector<8xf32>
    %109 = vector.shape_cast %108 : vector<8xf32> to vector<8x1xf32>
    %cst_34 = arith.constant dense<0.000000e+00> : vector<8x4xf32>
    %110 = tpu.matmul %107, %101, %cst_34 {dimension_numbers = #tpu.dot_dimension_numbers<[1], [0], [0], [1], [0, 0, 1, 1], [], []>} : vector<8x8xf32>, vector<8x4xf32>, vector<8x4xf32> -> vector<8x4xf32>
    %111 = vector.broadcast %109 : vector<8x1xf32> to vector<8x4xf32>
    %112 = arith.divf %110, %111 : vector<8x4xf32>
    %113 = vector.extract_strided_slice %12 {offsets = [0, 28], sizes = [8, 4], strides = [1, 1]} : vector<8x32xf32> to vector<8x4xf32>
    %114 = vector.extract_strided_slice %13 {offsets = [0, 28], sizes = [8, 4], strides = [1, 1]} : vector<8x32xf32> to vector<8x4xf32>
    %115 = vector.extract_strided_slice %14 {offsets = [0, 28], sizes = [8, 4], strides = [1, 1]} : vector<8x32xf32> to vector<8x4xf32>
    %cst_35 = arith.constant dense<0.000000e+00> : vector<8x8xf32>
    %116 = tpu.matmul %113, %114, %cst_35 {dimension_numbers = #tpu.dot_dimension_numbers<[1], [1], [0], [0], [0, 0, 1, 0], [], []>} : vector<8x4xf32>, vector<8x4xf32>, vector<8x8xf32> -> vector<8x8xf32>
    %cst_36 = arith.constant dense<0xFF800000> : vector<8xf32>
    %117 = vector.multi_reduction <maximumf>, %116, %cst_36 [1] : vector<8x8xf32> to vector<8xf32>
    %118 = vector.shape_cast %117 : vector<8xf32> to vector<8x1xf32>
    %119 = vector.broadcast %118 : vector<8x1xf32> to vector<8x8xf32>
    %120 = arith.subf %116, %119 : vector<8x8xf32>
    %121 = math.exp %120 : vector<8x8xf32>
    %cst_37 = arith.constant dense<0.000000e+00> : vector<8xf32>
    %122 = vector.multi_reduction <add>, %121, %cst_37 [1] : vector<8x8xf32> to vector<8xf32>
    %123 = vector.shape_cast %122 : vector<8xf32> to vector<8x1xf32>
    %cst_38 = arith.constant dense<0.000000e+00> : vector<8x4xf32>
    %124 = tpu.matmul %121, %115, %cst_38 {dimension_numbers = #tpu.dot_dimension_numbers<[1], [0], [0], [1], [0, 0, 1, 1], [], []>} : vector<8x8xf32>, vector<8x4xf32>, vector<8x4xf32> -> vector<8x4xf32>
    %125 = vector.broadcast %123 : vector<8x1xf32> to vector<8x4xf32>
    %126 = arith.divf %124, %125 : vector<8x4xf32>
    %127 = tpu.concatenate %28, %42, %56, %70, %84, %98, %112, %126 in 1 : vector<8x4xf32>, vector<8x4xf32>, vector<8x4xf32>, vector<8x4xf32>, vector<8x4xf32>, vector<8x4xf32>, vector<8x4xf32>, vector<8x4xf32> -> vector<8x32xf32>
    %c0_39 = arith.constant 0 : index
    %c0_40 = arith.constant 0 : index
    %128 = vector.load %arg7[%c0_39, %c0_40] : memref<8x32xf32, #tpu.memory_space<vmem>>, vector<8x32xf32>
    %cst_41 = arith.constant dense<0.000000e+00> : vector<8x32xf32>
    %129 = tpu.matmul %127, %10, %cst_41 {dimension_numbers = #tpu.dot_dimension_numbers<[1], [0], [0], [1], [0, 0, 1, 1], [], []>} : vector<8x32xf32>, vector<32x32xf32>, vector<8x32xf32> -> vector<8x32xf32>
    %130 = arith.addf %128, %129 : vector<8x32xf32>
    %c0_42 = arith.constant 0 : index
    %c0_43 = arith.constant 0 : index
    %131 = vector.load %arg7[%c0_42, %c0_43] : memref<8x32xf32, #tpu.memory_space<vmem>>, vector<8x32xf32>
    tpu.vector_store %arg7[%c0_42, %c0_43], %130 {strides = array<i32>} : memref<8x32xf32, #tpu.memory_space<vmem>>, vector<8x32xf32>,
    %c0_i32_44 = arith.constant 0 : i32
    %132 = arith.cmpi eq, %arg1, %c0_i32_44 : i32
    %133 = arith.extui %132 : i1 to i32
    %c0_i32_45 = arith.constant 0 : i32
    %134 = arith.cmpi ne, %133, %c0_i32_45 : i32
    scf.if %134 {
      %c0_46 = arith.constant 0 : index
      %c0_47 = arith.constant 0 : index
      %135 = vector.load %arg7[%c0_46, %c0_47] : memref<8x32xf32, #tpu.memory_space<vmem>>, vector<8x32xf32>
      %c0_48 = arith.constant 0 : index
      %c0_49 = arith.constant 0 : index
      %136 = vector.load %arg5[%c0_48, %c0_49] : memref<1x32xf32, #tpu.memory_space<vmem>>, vector<1x32xf32>
      %137 = vector.broadcast %136 : vector<1x32xf32> to vector<8x32xf32>
      %138 = arith.addf %135, %137 : vector<8x32xf32>
      %c0_50 = arith.constant 0 : index
      %c0_51 = arith.constant 0 : index
      %c0_52 = arith.constant 0 : index
      %139 = vector.load %arg6[%c0_50, %c0_51, %c0_52] : memref<1x8x32xf32, #tpu.memory_space<vmem>>, vector<1x8x32xf32>
      %140 = vector.shape_cast %139 : vector<1x8x32xf32> to vector<8x32xf32>
      %141 = vector.shape_cast %138 : vector<8x32xf32> to vector<1x8x32xf32>
      tpu.vector_store %arg6[%c0_50, %c0_51, %c0_52], %141 {strides = array<i32>} : memref<1x8x32xf32, #tpu.memory_space<vmem>>, vector<1x8x32xf32>,
    } else {
    }
    return
  }
  func.func @transform_0(%arg0: i32, %arg1: i32) -> (i32, i32, i32) {
    %c0_i32 = arith.constant 0 : i32
    %c0_i32_0 = arith.constant 0 : i32
    %c0_i32_1 = arith.constant 0 : i32
    return %arg0, %c0_i32, %c0_i32_0 : i32, i32, i32
  }
  func.func @transform_1(%arg0: i32, %arg1: i32) -> (i32, i32, i32) {
    %c0_i32 = arith.constant 0 : i32
    %c0_i32_0 = arith.constant 0 : i32
    %c0_i32_1 = arith.constant 0 : i32
    %c0_i32_2 = arith.constant 0 : i32
    return %c0_i32, %c0_i32_0, %c0_i32_1 : i32, i32, i32
  }
  func.func @transform_2(%arg0: i32, %arg1: i32) -> (i32, i32, i32) {
    %c0_i32 = arith.constant 0 : i32
    %c0_i32_0 = arith.constant 0 : i32
    %c0_i32_1 = arith.constant 0 : i32
    %c0_i32_2 = arith.constant 0 : i32
    return %c0_i32, %c0_i32_0, %c0_i32_1 : i32, i32, i32
  }
  func.func @transform_3(%arg0: i32, %arg1: i32) -> (i32, i32) {
    %c0_i32 = arith.constant 0 : i32
    %c0_i32_0 = arith.constant 0 : i32
    %c0_i32_1 = arith.constant 0 : i32
    return %c0_i32, %c0_i32_0 : i32, i32
  }
  func.func @transform_4(%arg0: i32, %arg1: i32) -> (i32, i32, i32) {
    %c0_i32 = arith.constant 0 : i32
    %c0_i32_0 = arith.constant 0 : i32
    %c0_i32_1 = arith.constant 0 : i32
    return %arg0, %c0_i32, %c0_i32_0 : i32, i32, i32
  }
}

</mosaic_0001>

<llo_original>
// kernel: attention_forward.1
$region0: #{attention_forward.1}
  #allocation0 [shape = 'u32[]', space=smem, size = 0x4, offset = 0x4, fixed_abs, tag = 'smem constant byte address 0x4 - core index']
  #allocation1 [shape = 'u32[72,128]{1,0:T(1,128)}', space=vmem, size = 0x9000, scoped, tag = 'internal scratch']
  #allocation2 [shape = 'f32[8,32]{1,0:T(8,128)}', space=vmem, size = 0x1000, scoped, tag = 'scratch operand']
  %s0 = inlined_call_operand.vmem [shape: f32[2,8,32], index: 0, kind: input, shape index: {}]
  %s1 = inlined_call_operand.vmem [shape: f32[1,32,96], index: 1, kind: input, shape index: {}]
  %s2 = inlined_call_operand.vmem [shape: f32[1,32,32], index: 2, kind: input, shape index: {}]
  %s3 = inlined_call_operand.vmem [shape: f32[1,32], index: 3, kind: input, shape index: {}]
  %s4 = inlined_call_operand.hbm [shape: f32[2,8,32], index: 4, kind: output, shape index: {}]
  %s5 = sld [smem:[#allocation0]]
  $region57: #{attention_forward.1} parent=0
    _
  %s7 = ssub.s32 1, %s5
  %s8 = scalar_select 0, %s7, %s5
  $region1: #{attention_forward.1} parent=0
    #allocation3 [shape = 'u8[8192]{0}', space=vmem, size = 0x2000, scoped, tag = 'output window, operand 0']
    #allocation4 [shape = 's32[2]{0}', space=sflag, size = 0x8, scoped, tag = 'scoped memory for attention_forward.1']
    %9 = vsyncpa [#allocation4], 0
    %s10 = scalar_lea.sflag [#allocation4], 1
    %11 = vsyncpa %s10, 0
    loop: start=0, step=1, limit=4
    $region2: #{attention_forward.1} parent=1 // loop_pre_header
      _
    $region3: #{attention_forward.1} parent=1 // loop_header
      %s13 = sphi 0, %s17
      %p14 = scmp.ge.s32.totalorder %s13, 4
      %s20 = sphi 0, %s32
      %s21 = sphi 0, %s28
      %s22 = sphi 0, %s20
      %s23 = sphi 0, %s21
      %s24 = sphi 0, %s22
      %s25 = sphi 0, %s23
      %s35 = sphi 0, %s37
      %s38 = sphi 0, %s35
      %s39 = sphi 0, %s38
      %s55 = sphi 0, %s39
      %s59 = sphi 0, %s59
      %s61 = sphi 0, %s59
      %s62 = sphi 0, %s61
      %s76 = sphi 0, %s62
      %s80 = sphi 0, %s80
      %s82 = sphi 0, %s80
      %s83 = sphi 0, %s82
      %s97 = sphi 0, %s83
      %s101 = sphi 0, %s101
      %s103 = sphi 0, %s101
      %s104 = sphi 0, %s103
      %s118 = sphi 0, %s104
      %s124 = sphi 0, %s126
      %s127 = sphi 0, %s124
      %s128 = sphi 0, %s127
      %s144 = sphi 0, %s128
    $region4: #{attention_forward.1} parent=1 // loop_header_branch
      %16 = sbr.rel (%p14) target = $region8
    $region5: #{attention_forward.1} parent=1 // loop_body
      %s18 = ssub.s32 %s13, 1
      %s19 = ssub.s32 %s13, 2
      %s26 = sadd.s32 1, %s21
      %p27 = scmp.ge.s32.totalorder %s26, 1
      %s28 = scalar_select %p27, 0, %s26
      %s29 = sadd.s32 1, %s20
      %s30 = scalar_select %p27, %s29, %s20
      %p31 = scmp.ge.s32.totalorder %s30, 2
      %s32 = scalar_select %p31, 0, %s30
      %s33 = ssub.s32 %s20, %s32
      %p34 = scmp.eq.s32.totalorder %s33, 0
      %s36 = sadd.s32 %s35, 1
      %s37 = scalar_select %p34, %s35, %s36
      %p40 = pneg %p34
      %p41 = scmp.eq.s32.totalorder %s13, 1
      %p42 = por %p40, %p41
      %p43 = scmp.ne.s32.totalorder %s35, %s38
      %p44 = scmp.eq.s32.totalorder %s13, 0
      %p45 = por %p43, %p44
      %p46 = scmp.ne.s32.totalorder %s35, %s38
      %p47 = scmp.eq.s32.totalorder %s18, 1
      %p48 = por %p46, %p47
      %p49 = scmp.ne.s32.totalorder %s38, %s39
      %p50 = scmp.eq.s32.totalorder %s18, 0
      %p51 = por %p49, %p50
      %p52 = scmp.ne.s32.totalorder %s38, %s39
      %p53 = scmp.eq.s32.totalorder %s19, 1
      %p54 = por %p52, %p53
      %p56 = scmp.ne.s32.totalorder %s39, %s55
      %p57 = scmp.eq.s32.totalorder %s19, 0
      %p58 = por %p56, %p57
      %s60 = sadd.s32 %s59, 1
      %p63 = scmp.eq.s32.totalorder %s13, 1
      %p64 = scmp.ne.s32.totalorder %s59, %s61
      %p65 = scmp.eq.s32.totalorder %s13, 0
      %p66 = por %p64, %p65
      %p67 = scmp.ne.s32.totalorder %s59, %s61
      %p68 = scmp.eq.s32.totalorder %s18, 1
      %p69 = por %p67, %p68
      %p70 = scmp.ne.s32.totalorder %s61, %s62
      %p71 = scmp.eq.s32.totalorder %s18, 0
      %p72 = por %p70, %p71
      %p73 = scmp.ne.s32.totalorder %s61, %s62
      %p74 = scmp.eq.s32.totalorder %s19, 1
      %p75 = por %p73, %p74
      %p77 = scmp.ne.s32.totalorder %s62, %s76
      %p78 = scmp.eq.s32.totalorder %s19, 0
      %p79 = por %p77, %p78
      %s81 = sadd.s32 %s80, 1
      %p84 = scmp.eq.s32.totalorder %s13, 1
      %p85 = scmp.ne.s32.totalorder %s80, %s82
      %p86 = scmp.eq.s32.totalorder %s13, 0
      %p87 = por %p85, %p86
      %p88 = scmp.ne.s32.totalorder %s80, %s82
      %p89 = scmp.eq.s32.totalorder %s18, 1
      %p90 = por %p88, %p89
      %p91 = scmp.ne.s32.totalorder %s82, %s83
      %p92 = scmp.eq.s32.totalorder %s18, 0
      %p93 = por %p91, %p92
      %p94 = scmp.ne.s32.totalorder %s82, %s83
      %p95 = scmp.eq.s32.totalorder %s19, 1
      %p96 = por %p94, %p95
      %p98 = scmp.ne.s32.totalorder %s83, %s97
      %p99 = scmp.eq.s32.totalorder %s19, 0
      %p100 = por %p98, %p99
      %s102 = sadd.s32 %s101, 1
      %p105 = scmp.eq.s32.totalorder %s13, 1
      %p106 = scmp.ne.s32.totalorder %s101, %s103
      %p107 = scmp.eq.s32.totalorder %s13, 0
      %p108 = por %p106, %p107
      %p109 = scmp.ne.s32.totalorder %s101, %s103
      %p110 = scmp.eq.s32.totalorder %s18, 1
      %p111 = por %p109, %p110
      %p112 = scmp.ne.s32.totalorder %s103, %s104
      %p113 = scmp.eq.s32.totalorder %s18, 0
      %p114 = por %p112, %p113
      %p115 = scmp.ne.s32.totalorder %s103, %s104
      %p116 = scmp.eq.s32.totalorder %s19, 1
      %p117 = por %p115, %p116
      %p119 = scmp.ne.s32.totalorder %s104, %s118
      %p120 = scmp.eq.s32.totalorder %s19, 0
      %p121 = por %p119, %p120
      %s122 = ssub.s32 %s20, %s32
      %p123 = scmp.eq.s32.totalorder %s122, 0
      %s125 = sadd.s32 %s124, 1
      %s126 = scalar_select %p123, %s124, %s125
      %p129 = pneg %p123
      %p130 = scmp.eq.s32.totalorder %s13, 1
      %p131 = por %p129, %p130
      %p132 = scmp.ne.s32.totalorder %s124, %s127
      %p133 = scmp.eq.s32.totalorder %s13, 0
      %p134 = por %p132, %p133
      %p135 = scmp.ne.s32.totalorder %s124, %s127
      %p136 = scmp.eq.s32.totalorder %s18, 1
      %p137 = por %p135, %p136
      %p138 = scmp.ne.s32.totalorder %s127, %s128
      %p139 = scmp.eq.s32.totalorder %s18, 0
      %p140 = por %p138, %p139
      %p141 = scmp.ne.s32.totalorder %s127, %s128
      %p142 = scmp.eq.s32.totalorder %s19, 1
      %p143 = por %p141, %p142
      %p145 = scmp.ne.s32.totalorder %s128, %s144
      %p146 = scmp.eq.s32.totalorder %s19, 0
      %p147 = por %p145, %p146
      %p148 = scmp.le.s32.totalorder 1, %s13
      %p149 = scmp.lt.s32.totalorder %s13, 3
      %p150 = pnand %p148, %p149
      %p151 = pneg %p150
      // Predicated region
      $region9: #{attention_forward.1} parent=5 // pred_check
        _
      $region10: #{attention_forward.1} parent=5 // pred_check_branch
        %153 = sbr.rel (%p150) target = $region12
      $region11: #{attention_forward.1} parent=5 // pred_region
        %s154 = ssub.s32 %s13, 1
        // Predicated region
        $region13: #{attention_forward.1} parent=11 // pred_check
          %p155 = pneg %p72
        $region14: #{attention_forward.1} parent=11 // pred_check_branch
          %157 = sbr.rel (%p155) target = $region16
        $region15: #{attention_forward.1} parent=11 // pred_region
          _
        $region16: #{attention_forward.1} parent=11 // pred_fallthru
          _
        // Predicated region
        $region17: #{attention_forward.1} parent=11 // pred_check
          %p158 = pneg %p93
        $region18: #{attention_forward.1} parent=11 // pred_check_branch
          %160 = sbr.rel (%p158) target = $region20
        $region19: #{attention_forward.1} parent=11 // pred_region
          _
        $region20: #{attention_forward.1} parent=11 // pred_fallthru
          _
        // Predicated region
        $region21: #{attention_forward.1} parent=11 // pred_check
          %p161 = pneg %p114
        $region22: #{attention_forward.1} parent=11 // pred_check_branch
          %163 = sbr.rel (%p161) target = $region24
        $region23: #{attention_forward.1} parent=11 // pred_region
          _
        $region24: #{attention_forward.1} parent=11 // pred_fallthru
          _
      $region12: #{attention_forward.1} parent=5 // pred_fallthru
        _
      %p164 = scmp.lt.s32.totalorder %s13, 2
      // Predicated region
      $region25: #{attention_forward.1} parent=5 // pred_check
        %p165 = pneg %p164
      $region26: #{attention_forward.1} parent=5 // pred_check_branch
        %167 = sbr.rel (%p165) target = $region28
      $region27: #{attention_forward.1} parent=5 // pred_region
        // Predicated region
        $region29: #{attention_forward.1} parent=27 // pred_check
          %p168 = pneg %p45
        $region30: #{attention_forward.1} parent=27 // pred_check_branch
          %170 = sbr.rel (%p168) target = $region32
        $region31: #{attention_forward.1} parent=27 // pred_region
          %p171 = scmp.lt.s32.totalorder %s20, 1
          %s172 = scalar_select %p171, %s20, 1
          %s173 = smul.addr %s172, 8
          %s174 = scalar_lea.vmem %s0, %s173
        $region32: #{attention_forward.1} parent=27 // pred_fallthru
          _
      $region28: #{attention_forward.1} parent=5 // pred_fallthru
        _
      %p175 = scmp.le.s32.totalorder 1, %s13
      %p176 = scmp.lt.s32.totalorder %s13, 3
      %p177 = pnand %p175, %p176
      %p178 = pneg %p177
      // Predicated region
      $region33: #{attention_forward.1} parent=5 // pred_check
        _
      $region34: #{attention_forward.1} parent=5 // pred_check_branch
        %180 = sbr.rel (%p177) target = $region36
      $region35: #{attention_forward.1} parent=5 // pred_region
        %s181 = ssub.s32 %s13, 1
        %p182 = scmp.lt.s32.totalorder %s22, 1
        %s183 = scalar_select %p182, %s22, 1
        %s184 = smul.addr %s183, 8
        %s185 = scalar_lea.vmem %s0, %s184
        %p186 = pneg %p51
        %p187 = pneg %p48
        %p188 = pneg %p72
        %p189 = pneg %p69
        %p190 = pneg %p93
        %p191 = pneg %p90
        %p192 = pneg %p114
        %p193 = pneg %p111
        %p194 = pneg %p140
        %p195 = pneg %p137
        %s196 = sand.u32 %s127, 1
        %s197 = scalar_lea.sflag [#allocation4], %s196
        %s198 = sand.u32 %s127, 1
        %s199 = smul.addr %s198, 8
        %s200 = scalar_lea.vmem [#allocation3], %s199
        %p201 = scmp.lt.s32.totalorder %s22, 1
        %s202 = scalar_select %p201, %s22, 1
        %s203 = smul.addr %s202, 8
        %s204 = scalar_lea.vmem %s0, %s203
        %p205 = scmp.eq.s32.totalorder %s23, 0
        // Predicated region
        $region37: #{attention_forward.1} parent=35 // pred_check
          %p206 = pneg %p205
        $region38: #{attention_forward.1} parent=35 // pred_check_branch
          %208 = sbr.rel (%p206) target = $region40
        $region39: #{attention_forward.1} parent=35 // pred_region
          %vm209 = vcmask 261120
          %210 = vst.msk [vmem:[#allocation2] sm:$0xff] %vm209, 0.0
        $region40: #{attention_forward.1} parent=35 // pred_fallthru
          _
        %v211 = vld [vmem:[%s204] sm:$0xff]
        %s212 = smul.u32 %s23, 32
        %s213 = scalar_lea.vmem %s1, %s212
        %v214 = vld [vmem:[%s213] sm:$0xff]
        %v215 = vld [vmem:[%s213 + $0x8] sm:$0xff]
        %v216 = vld [vmem:[%s213 + $0x10] sm:$0xff]
        %v217 = vld [vmem:[%s213 + $0x18] sm:$0xff]
        %s218 = scalar_lea.vmem %s2, %s212
        %v219 = vld [vmem:[%s218] sm:$0xff]
        %v220 = vld [vmem:[%s218 + $0x8] sm:$0xff]
        %v221 = vld [vmem:[%s218 + $0x10] sm:$0xff]
        %v222 = vld [vmem:[%s218 + $0x18] sm:$0xff]
        %vm223 = vcmask 261120
        %v225 = vsel %vm223, %v211, 0
        %227 = vmatpush.msra.mxu0 0.0
        %228 = vmatpush.msra.mxu0 0.0
        %229 = vmatpush.msra.mxu0 0.0
        %230 = vmatpush.msra.mxu0 0.0
        %231 = vmatpush.msra.mxu0 0.0
        %232 = vmatpush.msra.mxu0 0.0
        %233 = vmatpush.msra.mxu0 0.0
        %234 = vmatpush.msra.mxu0 0.0
        %235 = vmatpush.msra.mxu0 0.0
        %236 = vmatpush.msra.mxu0 0.0
        %237 = vmatpush.msra.mxu0 0.0
        %238 = vmatpush.msra.mxu0 0.0
        %239 = vmatpush.msra.mxu0 %v217
        %240 = vmatpush.msra.mxu0 %v216
        %241 = vmatpush.msra.mxu0 %v215
        %242 = vmatpush.msra.mxu0 %v214
        %243 = vmatmul.f32.gmra.mxu0 %v225
        %v244 = vpop.f32.mrf.mxu0
        %v245 = vadd.f32 0.0, %v244
        %246 = vdwg.mxu0
        %248 = vrot.lane.b32.xlu0 %v245, 96
        %v249 = vpop.permute.xlu0 %248
        %vm250 = vcmask 31744
        %v251 = vsel %vm250, %v245, 0
        %v253 = vsel %vm250, %v249, 0
        %255 = vmatpush.xpose.msra.mxu0 0.0
        %256 = vmatpush.xpose.msra.mxu0 0.0
        %257 = vmatpush.xpose.msra.mxu0 0.0
        %258 = vmatpush.xpose.msra.mxu0 0.0
        %259 = vmatpush.xpose.msra.mxu0 0.0
        %260 = vmatpush.xpose.msra.mxu0 0.0
        %261 = vmatpush.xpose.msra.mxu0 0.0
        %262 = vmatpush.xpose.msra.mxu0 0.0
        %263 = vmatpush.xpose.msra.mxu0 0.0
        %264 = vmatpush.xpose.msra.mxu0 0.0
        %265 = vmatpush.xpose.msra.mxu0 0.0
        %266 = vmatpush.xpose.msra.mxu0 0.0
        %267 = vmatpush.xpose.msra.mxu0 0.0
        %268 = vmatpush.xpose.msra.mxu0 0.0
        %269 = vmatpush.xpose.msra.mxu0 0.0
        %270 = vmatpush.xpose.msra.mxu0 %v253
        %271 = vmatmul.f32.gmra.mxu0 %v251
        %v272 = vpop.f32.mrf.mxu0
        %v273 = vadd.f32 0.0, %v272
        %274 = vdwg.mxu0
        %vm275 = vcmask 64512
        %v276 = vsel %vm275, %v273, -inf
        %277 = vmax.xlane.f32.xlu0 %v276
        %v278 = vpop.xlane.xlu0 %277
        %v279 = vsub.f32 %v273, %v278
        %v280 = vmul.f32 %v279, 1.442695
        %v281 = vpow.pop %v280
        %v282 = vsel %vm275, %v281, 0.0
        %283 = vadd.xlane.f32.xlu0 %v282
        %v284 = vpop.xlane.xlu0 %283
        %285 = vrot.lane.b32.xlu0 %v245, 64
        %v286 = vpop.permute.xlu0 %285
        %v289 = vsel %vm275, %v281, 0
        %291 = vmatpush.msra.mxu0 0.0
        %292 = vmatpush.msra.mxu0 0.0
        %293 = vmatpush.msra.mxu0 0.0
        %294 = vmatpush.msra.mxu0 0.0
        %295 = vmatpush.msra.mxu0 0.0
        %296 = vmatpush.msra.mxu0 0.0
        %297 = vmatpush.msra.mxu0 0.0
        %298 = vmatpush.msra.mxu0 0.0
        %299 = vmatpush.msra.mxu0 0.0
        %300 = vmatpush.msra.mxu0 0.0
        %301 = vmatpush.msra.mxu0 0.0
        %302 = vmatpush.msra.mxu0 0.0
        %303 = vmatpush.msra.mxu0 0.0
        %304 = vmatpush.msra.mxu0 0.0
        %305 = vmatpush.msra.mxu0 0.0
        %306 = vmatpush.msra.mxu0 %v286
        %307 = vmatmul.f32.gmra.mxu0 %v289
        %v308 = vpop.f32.mrf.mxu0
        %v309 = vadd.f32 0.0, %v308
        %310 = vdwg.mxu0
        %v311 = vrcp.pop %v284
        %v312 = vmul.f32 %v284, %v311
        %v313 = vsub.f32 1.0, %v312
        %v314 = vmul.f32 %v311, %v313
        %v315 = vadd.f32 %v311, %v314
        %vm316 = vweird.f32 %v284
        %vm317 = vweird.f32 %v311
        %vm318 = vmor %vm316, %vm317
        %v319 = vsel %vm318, %v311, %v315
        %v320 = vand.u32 2147483647, %v284
        %vm321 = vcmp.eq.f32.partialorder %v320, 8.507059e+37
        %v322 = vand.u32 %v284, 2147483648
        %v323 = vor.u32 1.1754944e-38, %v322
        %v324 = vsel %vm321, %v323, %v319
        %v325 = vmul.f32 %v309, %v324
        %326 = vrot.lane.b32.xlu0 %v245, 124
        %v327 = vpop.permute.xlu0 %326
        %328 = vrot.lane.b32.xlu0 %v245, 92
        %v329 = vpop.permute.xlu0 %328
        %v330 = vsel %vm250, %v327, 0
        %v332 = vsel %vm250, %v329, 0
        %334 = vmatpush.xpose.msra.mxu0 0.0
        %335 = vmatpush.xpose.msra.mxu0 0.0
        %336 = vmatpush.xpose.msra.mxu0 0.0
        %337 = vmatpush.xpose.msra.mxu0 0.0
        %338 = vmatpush.xpose.msra.mxu0 0.0
        %339 = vmatpush.xpose.msra.mxu0 0.0
        %340 = vmatpush.xpose.msra.mxu0 0.0
        %341 = vmatpush.xpose.msra.mxu0 0.0
        %342 = vmatpush.xpose.msra.mxu0 0.0
        %343 = vmatpush.xpose.msra.mxu0 0.0
        %344 = vmatpush.xpose.msra.mxu0 0.0
        %345 = vmatpush.xpose.msra.mxu0 0.0
        %346 = vmatpush.xpose.msra.mxu0 0.0
        %347 = vmatpush.xpose.msra.mxu0 0.0
        %348 = vmatpush.xpose.msra.mxu0 0.0
        %349 = vmatpush.xpose.msra.mxu0 %v332
        %350 = vmatmul.f32.gmra.mxu0 %v330
        %v351 = vpop.f32.mrf.mxu0
        %v352 = vadd.f32 0.0, %v351
        %353 = vdwg.mxu0
        %v354 = vsel %vm275, %v352, -inf
        %355 = vmax.xlane.f32.xlu0 %v354
        %v356 = vpop.xlane.xlu0 %355
        %v357 = vsub.f32 %v352, %v356
        %v358 = vmul.f32 %v357, 1.442695
        %v359 = vpow.pop %v358
        %v360 = vsel %vm275, %v359, 0.0
        %361 = vadd.xlane.f32.xlu0 %v360
        %v362 = vpop.xlane.xlu0 %361
        %363 = vrot.lane.b32.xlu0 %v245, 60
        %v364 = vpop.permute.xlu0 %363
        %v367 = vsel %vm275, %v359, 0
        %369 = vmatpush.msra.mxu0 0.0
        %370 = vmatpush.msra.mxu0 0.0
        %371 = vmatpush.msra.mxu0 0.0
        %372 = vmatpush.msra.mxu0 0.0
        %373 = vmatpush.msra.mxu0 0.0
        %374 = vmatpush.msra.mxu0 0.0
        %375 = vmatpush.msra.mxu0 0.0
        %376 = vmatpush.msra.mxu0 0.0
        %377 = vmatpush.msra.mxu0 0.0
        %378 = vmatpush.msra.mxu0 0.0
        %379 = vmatpush.msra.mxu0 0.0
        %380 = vmatpush.msra.mxu0 0.0
        %381 = vmatpush.msra.mxu0 0.0
        %382 = vmatpush.msra.mxu0 0.0
        %383 = vmatpush.msra.mxu0 0.0
        %384 = vmatpush.msra.mxu0 %v364
        %385 = vmatmul.f32.gmra.mxu0 %v367
        %v386 = vpop.f32.mrf.mxu0
        %v387 = vadd.f32 0.0, %v386
        %388 = vdwg.mxu0
        %v389 = vrcp.pop %v362
        %v390 = vmul.f32 %v362, %v389
        %v391 = vsub.f32 1.0, %v390
        %v392 = vmul.f32 %v389, %v391
        %v393 = vadd.f32 %v389, %v392
        %vm394 = vweird.f32 %v362
        %vm395 = vweird.f32 %v389
        %vm396 = vmor %vm394, %vm395
        %v397 = vsel %vm396, %v389, %v393
        %v398 = vand.u32 2147483647, %v362
        %vm399 = vcmp.eq.f32.partialorder %v398, 8.507059e+37
        %v400 = vand.u32 %v362, 2147483648
        %v401 = vor.u32 1.1754944e-38, %v400
        %v402 = vsel %vm399, %v401, %v397
        %v403 = vmul.f32 %v387, %v402
        %404 = vrot.lane.b32.xlu0 %v245, 120
        %v405 = vpop.permute.xlu0 %404
        %406 = vrot.lane.b32.xlu0 %v245, 88
        %v407 = vpop.permute.xlu0 %406
        %v408 = vsel %vm250, %v405, 0
        %v410 = vsel %vm250, %v407, 0
        %412 = vmatpush.xpose.msra.mxu0 0.0
        %413 = vmatpush.xpose.msra.mxu0 0.0
        %414 = vmatpush.xpose.msra.mxu0 0.0
        %415 = vmatpush.xpose.msra.mxu0 0.0
        %416 = vmatpush.xpose.msra.mxu0 0.0
        %417 = vmatpush.xpose.msra.mxu0 0.0
        %418 = vmatpush.xpose.msra.mxu0 0.0
        %419 = vmatpush.xpose.msra.mxu0 0.0
        %420 = vmatpush.xpose.msra.mxu0 0.0
        %421 = vmatpush.xpose.msra.mxu0 0.0
        %422 = vmatpush.xpose.msra.mxu0 0.0
        %423 = vmatpush.xpose.msra.mxu0 0.0
        %424 = vmatpush.xpose.msra.mxu0 0.0
        %425 = vmatpush.xpose.msra.mxu0 0.0
        %426 = vmatpush.xpose.msra.mxu0 0.0
        %427 = vmatpush.xpose.msra.mxu0 %v410
        %428 = vmatmul.f32.gmra.mxu0 %v408
        %v429 = vpop.f32.mrf.mxu0
        %v430 = vadd.f32 0.0, %v429
        %431 = vdwg.mxu0
        %v432 = vsel %vm275, %v430, -inf
        %433 = vmax.xlane.f32.xlu0 %v432
        %v434 = vpop.xlane.xlu0 %433
        %v435 = vsub.f32 %v430, %v434
        %v436 = vmul.f32 %v435, 1.442695
        %v437 = vpow.pop %v436
        %v438 = vsel %vm275, %v437, 0.0
        %439 = vadd.xlane.f32.xlu0 %v438
        %v440 = vpop.xlane.xlu0 %439
        %441 = vrot.lane.b32.xlu0 %v245, 56
        %v442 = vpop.permute.xlu0 %441
        %v445 = vsel %vm275, %v437, 0
        %447 = vmatpush.msra.mxu0 0.0
        %448 = vmatpush.msra.mxu0 0.0
        %449 = vmatpush.msra.mxu0 0.0
        %450 = vmatpush.msra.mxu0 0.0
        %451 = vmatpush.msra.mxu0 0.0
        %452 = vmatpush.msra.mxu0 0.0
        %453 = vmatpush.msra.mxu0 0.0
        %454 = vmatpush.msra.mxu0 0.0
        %455 = vmatpush.msra.mxu0 0.0
        %456 = vmatpush.msra.mxu0 0.0
        %457 = vmatpush.msra.mxu0 0.0
        %458 = vmatpush.msra.mxu0 0.0
        %459 = vmatpush.msra.mxu0 0.0
        %460 = vmatpush.msra.mxu0 0.0
        %461 = vmatpush.msra.mxu0 0.0
        %462 = vmatpush.msra.mxu0 %v442
        %463 = vmatmul.f32.gmra.mxu0 %v445
        %v464 = vpop.f32.mrf.mxu0
        %v465 = vadd.f32 0.0, %v464
        %466 = vdwg.mxu0
        %v467 = vrcp.pop %v440
        %v468 = vmul.f32 %v440, %v467
        %v469 = vsub.f32 1.0, %v468
        %v470 = vmul.f32 %v467, %v469
        %v471 = vadd.f32 %v467, %v470
        %vm472 = vweird.f32 %v440
        %vm473 = vweird.f32 %v467
        %vm474 = vmor %vm472, %vm473
        %v475 = vsel %vm474, %v467, %v471
        %v476 = vand.u32 2147483647, %v440
        %vm477 = vcmp.eq.f32.partialorder %v476, 8.507059e+37
        %v478 = vand.u32 %v440, 2147483648
        %v479 = vor.u32 1.1754944e-38, %v478
        %v480 = vsel %vm477, %v479, %v475
        %v481 = vmul.f32 %v465, %v480
        %482 = vrot.lane.b32.xlu0 %v245, 116
        %v483 = vpop.permute.xlu0 %482
        %484 = vrot.lane.b32.xlu0 %v245, 84
        %v485 = vpop.permute.xlu0 %484
        %v486 = vsel %vm250, %v483, 0
        %v488 = vsel %vm250, %v485, 0
        %490 = vmatpush.xpose.msra.mxu0 0.0
        %491 = vmatpush.xpose.msra.mxu0 0.0
        %492 = vmatpush.xpose.msra.mxu0 0.0
        %493 = vmatpush.xpose.msra.mxu0 0.0
        %494 = vmatpush.xpose.msra.mxu0 0.0
        %495 = vmatpush.xpose.msra.mxu0 0.0
        %496 = vmatpush.xpose.msra.mxu0 0.0
        %497 = vmatpush.xpose.msra.mxu0 0.0
        %498 = vmatpush.xpose.msra.mxu0 0.0
        %499 = vmatpush.xpose.msra.mxu0 0.0
        %500 = vmatpush.xpose.msra.mxu0 0.0
        %501 = vmatpush.xpose.msra.mxu0 0.0
        %502 = vmatpush.xpose.msra.mxu0 0.0
        %503 = vmatpush.xpose.msra.mxu0 0.0
        %504 = vmatpush.xpose.msra.mxu0 0.0
        %505 = vmatpush.xpose.msra.mxu0 %v488
        %506 = vmatmul.f32.gmra.mxu0 %v486
        %v507 = vpop.f32.mrf.mxu0
        %v508 = vadd.f32 0.0, %v507
        %509 = vdwg.mxu0
        %v510 = vsel %vm275, %v508, -inf
        %511 = vmax.xlane.f32.xlu0 %v510
        %v512 = vpop.xlane.xlu0 %511
        %v513 = vsub.f32 %v508, %v512
        %v514 = vmul.f32 %v513, 1.442695
        %v515 = vpow.pop %v514
        %v516 = vsel %vm275, %v515, 0.0
        %517 = vadd.xlane.f32.xlu0 %v516
        %v518 = vpop.xlane.xlu0 %517
        %519 = vrot.lane.b32.xlu0 %v245, 52
        %v520 = vpop.permute.xlu0 %519
        %v523 = vsel %vm275, %v515, 0
        %525 = vmatpush.msra.mxu0 0.0
        %526 = vmatpush.msra.mxu0 0.0
        %527 = vmatpush.msra.mxu0 0.0
        %528 = vmatpush.msra.mxu0 0.0
        %529 = vmatpush.msra.mxu0 0.0
        %530 = vmatpush.msra.mxu0 0.0
        %531 = vmatpush.msra.mxu0 0.0
        %532 = vmatpush.msra.mxu0 0.0
        %533 = vmatpush.msra.mxu0 0.0
        %534 = vmatpush.msra.mxu0 0.0
        %535 = vmatpush.msra.mxu0 0.0
        %536 = vmatpush.msra.mxu0 0.0
        %537 = vmatpush.msra.mxu0 0.0
        %538 = vmatpush.msra.mxu0 0.0
        %539 = vmatpush.msra.mxu0 0.0
        %540 = vmatpush.msra.mxu0 %v520
        %541 = vmatmul.f32.gmra.mxu0 %v523
        %v542 = vpop.f32.mrf.mxu0
        %v543 = vadd.f32 0.0, %v542
        %544 = vdwg.mxu0
        %v545 = vrcp.pop %v518
        %v546 = vmul.f32 %v518, %v545
        %v547 = vsub.f32 1.0, %v546
        %v548 = vmul.f32 %v545, %v547
        %v549 = vadd.f32 %v545, %v548
        %vm550 = vweird.f32 %v518
        %vm551 = vweird.f32 %v545
        %vm552 = vmor %vm550, %vm551
        %v553 = vsel %vm552, %v545, %v549
        %v554 = vand.u32 2147483647, %v518
        %vm555 = vcmp.eq.f32.partialorder %v554, 8.507059e+37
        %v556 = vand.u32 %v518, 2147483648
        %v557 = vor.u32 1.1754944e-38, %v556
        %v558 = vsel %vm555, %v557, %v553
        %v559 = vmul.f32 %v543, %v558
        %560 = vrot.lane.b32.xlu0 %v245, 112
        %v561 = vpop.permute.xlu0 %560
        %562 = vrot.lane.b32.xlu0 %v245, 80
        %v563 = vpop.permute.xlu0 %562
        %v564 = vsel %vm250, %v561, 0
        %v566 = vsel %vm250, %v563, 0
        %568 = vmatpush.xpose.msra.mxu0 0.0
        %569 = vmatpush.xpose.msra.mxu0 0.0
        %570 = vmatpush.xpose.msra.mxu0 0.0
        %571 = vmatpush.xpose.msra.mxu0 0.0
        %572 = vmatpush.xpose.msra.mxu0 0.0
        %573 = vmatpush.xpose.msra.mxu0 0.0
        %574 = vmatpush.xpose.msra.mxu0 0.0
        %575 = vmatpush.xpose.msra.mxu0 0.0
        %576 = vmatpush.xpose.msra.mxu0 0.0
        %577 = vmatpush.xpose.msra.mxu0 0.0
        %578 = vmatpush.xpose.msra.mxu0 0.0
        %579 = vmatpush.xpose.msra.mxu0 0.0
        %580 = vmatpush.xpose.msra.mxu0 0.0
        %581 = vmatpush.xpose.msra.mxu0 0.0
        %582 = vmatpush.xpose.msra.mxu0 0.0
        %583 = vmatpush.xpose.msra.mxu0 %v566
        %584 = vmatmul.f32.gmra.mxu0 %v564
        %v585 = vpop.f32.mrf.mxu0
        %v586 = vadd.f32 0.0, %v585
        %587 = vdwg.mxu0
        %v588 = vsel %vm275, %v586, -inf
        %589 = vmax.xlane.f32.xlu0 %v588
        %v590 = vpop.xlane.xlu0 %589
        %v591 = vsub.f32 %v586, %v590
        %v592 = vmul.f32 %v591, 1.442695
        %v593 = vpow.pop %v592
        %v594 = vsel %vm275, %v593, 0.0
        %595 = vadd.xlane.f32.xlu0 %v594
        %v596 = vpop.xlane.xlu0 %595
        %597 = vrot.lane.b32.xlu0 %v245, 48
        %v598 = vpop.permute.xlu0 %597
        %v601 = vsel %vm275, %v593, 0
        %603 = vmatpush.msra.mxu0 0.0
        %604 = vmatpush.msra.mxu0 0.0
        %605 = vmatpush.msra.mxu0 0.0
        %606 = vmatpush.msra.mxu0 0.0
        %607 = vmatpush.msra.mxu0 0.0
        %608 = vmatpush.msra.mxu0 0.0
        %609 = vmatpush.msra.mxu0 0.0
        %610 = vmatpush.msra.mxu0 0.0
        %611 = vmatpush.msra.mxu0 0.0
        %612 = vmatpush.msra.mxu0 0.0
        %613 = vmatpush.msra.mxu0 0.0
        %614 = vmatpush.msra.mxu0 0.0
        %615 = vmatpush.msra.mxu0 0.0
        %616 = vmatpush.msra.mxu0 0.0
        %617 = vmatpush.msra.mxu0 0.0
        %618 = vmatpush.msra.mxu0 %v598
        %619 = vmatmul.f32.gmra.mxu0 %v601
        %v620 = vpop.f32.mrf.mxu0
        %v621 = vadd.f32 0.0, %v620
        %622 = vdwg.mxu0
        %v623 = vrcp.pop %v596
        %v624 = vmul.f32 %v596, %v623
        %v625 = vsub.f32 1.0, %v624
        %v626 = vmul.f32 %v623, %v625
        %v627 = vadd.f32 %v623, %v626
        %vm628 = vweird.f32 %v596
        %vm629 = vweird.f32 %v623
        %vm630 = vmor %vm628, %vm629
        %v631 = vsel %vm630, %v623, %v627
        %v632 = vand.u32 2147483647, %v596
        %vm633 = vcmp.eq.f32.partialorder %v632, 8.507059e+37
        %v634 = vand.u32 %v596, 2147483648
        %v635 = vor.u32 1.1754944e-38, %v634
        %v636 = vsel %vm633, %v635, %v631
        %v637 = vmul.f32 %v621, %v636
        %638 = vrot.lane.b32.xlu0 %v245, 108
        %v639 = vpop.permute.xlu0 %638
        %640 = vrot.lane.b32.xlu0 %v245, 76
        %v641 = vpop.permute.xlu0 %640
        %v642 = vsel %vm250, %v639, 0
        %v644 = vsel %vm250, %v641, 0
        %646 = vmatpush.xpose.msra.mxu0 0.0
        %647 = vmatpush.xpose.msra.mxu0 0.0
        %648 = vmatpush.xpose.msra.mxu0 0.0
        %649 = vmatpush.xpose.msra.mxu0 0.0
        %650 = vmatpush.xpose.msra.mxu0 0.0
        %651 = vmatpush.xpose.msra.mxu0 0.0
        %652 = vmatpush.xpose.msra.mxu0 0.0
        %653 = vmatpush.xpose.msra.mxu0 0.0
        %654 = vmatpush.xpose.msra.mxu0 0.0
        %655 = vmatpush.xpose.msra.mxu0 0.0
        %656 = vmatpush.xpose.msra.mxu0 0.0
        %657 = vmatpush.xpose.msra.mxu0 0.0
        %658 = vmatpush.xpose.msra.mxu0 0.0
        %659 = vmatpush.xpose.msra.mxu0 0.0
        %660 = vmatpush.xpose.msra.mxu0 0.0
        %661 = vmatpush.xpose.msra.mxu0 %v644
        %662 = vmatmul.f32.gmra.mxu0 %v642
        %v663 = vpop.f32.mrf.mxu0
        %v664 = vadd.f32 0.0, %v663
        %665 = vdwg.mxu0
        %v666 = vsel %vm275, %v664, -inf
        %667 = vmax.xlane.f32.xlu0 %v666
        %v668 = vpop.xlane.xlu0 %667
        %v669 = vsub.f32 %v664, %v668
        %v670 = vmul.f32 %v669, 1.442695
        %v671 = vpow.pop %v670
        %v672 = vsel %vm275, %v671, 0.0
        %673 = vadd.xlane.f32.xlu0 %v672
        %v674 = vpop.xlane.xlu0 %673
        %675 = vrot.lane.b32.xlu0 %v245, 44
        %v676 = vpop.permute.xlu0 %675
        %v679 = vsel %vm275, %v671, 0
        %681 = vmatpush.msra.mxu0 0.0
        %682 = vmatpush.msra.mxu0 0.0
        %683 = vmatpush.msra.mxu0 0.0
        %684 = vmatpush.msra.mxu0 0.0
        %685 = vmatpush.msra.mxu0 0.0
        %686 = vmatpush.msra.mxu0 0.0
        %687 = vmatpush.msra.mxu0 0.0
        %688 = vmatpush.msra.mxu0 0.0
        %689 = vmatpush.msra.mxu0 0.0
        %690 = vmatpush.msra.mxu0 0.0
        %691 = vmatpush.msra.mxu0 0.0
        %692 = vmatpush.msra.mxu0 0.0
        %693 = vmatpush.msra.mxu0 0.0
        %694 = vmatpush.msra.mxu0 0.0
        %695 = vmatpush.msra.mxu0 0.0
        %696 = vmatpush.msra.mxu0 %v676
        %697 = vmatmul.f32.gmra.mxu0 %v679
        %v698 = vpop.f32.mrf.mxu0
        %v699 = vadd.f32 0.0, %v698
        %700 = vdwg.mxu0
        %v701 = vrcp.pop %v674
        %v702 = vmul.f32 %v674, %v701
        %v703 = vsub.f32 1.0, %v702
        %v704 = vmul.f32 %v701, %v703
        %v705 = vadd.f32 %v701, %v704
        %vm706 = vweird.f32 %v674
        %vm707 = vweird.f32 %v701
        %vm708 = vmor %vm706, %vm707
        %v709 = vsel %vm708, %v701, %v705
        %v710 = vand.u32 2147483647, %v674
        %vm711 = vcmp.eq.f32.partialorder %v710, 8.507059e+37
        %v712 = vand.u32 %v674, 2147483648
        %v713 = vor.u32 1.1754944e-38, %v712
        %v714 = vsel %vm711, %v713, %v709
        %v715 = vmul.f32 %v699, %v714
        %716 = vrot.lane.b32.xlu0 %v245, 104
        %v717 = vpop.permute.xlu0 %716
        %718 = vrot.lane.b32.xlu0 %v245, 72
        %v719 = vpop.permute.xlu0 %718
        %v720 = vsel %vm250, %v717, 0
        %v722 = vsel %vm250, %v719, 0
        %724 = vmatpush.xpose.msra.mxu0 0.0
        %725 = vmatpush.xpose.msra.mxu0 0.0
        %726 = vmatpush.xpose.msra.mxu0 0.0
        %727 = vmatpush.xpose.msra.mxu0 0.0
        %728 = vmatpush.xpose.msra.mxu0 0.0
        %729 = vmatpush.xpose.msra.mxu0 0.0
        %730 = vmatpush.xpose.msra.mxu0 0.0
        %731 = vmatpush.xpose.msra.mxu0 0.0
        %732 = vmatpush.xpose.msra.mxu0 0.0
        %733 = vmatpush.xpose.msra.mxu0 0.0
        %734 = vmatpush.xpose.msra.mxu0 0.0
        %735 = vmatpush.xpose.msra.mxu0 0.0
        %736 = vmatpush.xpose.msra.mxu0 0.0
        %737 = vmatpush.xpose.msra.mxu0 0.0
        %738 = vmatpush.xpose.msra.mxu0 0.0
        %739 = vmatpush.xpose.msra.mxu0 %v722
        %740 = vmatmul.f32.gmra.mxu0 %v720
        %v741 = vpop.f32.mrf.mxu0
        %v742 = vadd.f32 0.0, %v741
        %743 = vdwg.mxu0
        %v744 = vsel %vm275, %v742, -inf
        %745 = vmax.xlane.f32.xlu0 %v744
        %v746 = vpop.xlane.xlu0 %745
        %v747 = vsub.f32 %v742, %v746
        %v748 = vmul.f32 %v747, 1.442695
        %v749 = vpow.pop %v748
        %v750 = vsel %vm275, %v749, 0.0
        %751 = vadd.xlane.f32.xlu0 %v750
        %v752 = vpop.xlane.xlu0 %751
        %753 = vrot.lane.b32.xlu0 %v245, 40
        %v754 = vpop.permute.xlu0 %753
        %v757 = vsel %vm275, %v749, 0
        %759 = vmatpush.msra.mxu0 0.0
        %760 = vmatpush.msra.mxu0 0.0
        %761 = vmatpush.msra.mxu0 0.0
        %762 = vmatpush.msra.mxu0 0.0
        %763 = vmatpush.msra.mxu0 0.0
        %764 = vmatpush.msra.mxu0 0.0
        %765 = vmatpush.msra.mxu0 0.0
        %766 = vmatpush.msra.mxu0 0.0
        %767 = vmatpush.msra.mxu0 0.0
        %768 = vmatpush.msra.mxu0 0.0
        %769 = vmatpush.msra.mxu0 0.0
        %770 = vmatpush.msra.mxu0 0.0
        %771 = vmatpush.msra.mxu0 0.0
        %772 = vmatpush.msra.mxu0 0.0
        %773 = vmatpush.msra.mxu0 0.0
        %774 = vmatpush.msra.mxu0 %v754
        %775 = vmatmul.f32.gmra.mxu0 %v757
        %v776 = vpop.f32.mrf.mxu0
        %v777 = vadd.f32 0.0, %v776
        %778 = vdwg.mxu0
        %v779 = vrcp.pop %v752
        %v780 = vmul.f32 %v752, %v779
        %v781 = vsub.f32 1.0, %v780
        %v782 = vmul.f32 %v779, %v781
        %v783 = vadd.f32 %v779, %v782
        %vm784 = vweird.f32 %v752
        %vm785 = vweird.f32 %v779
        %vm786 = vmor %vm784, %vm785
        %v787 = vsel %vm786, %v779, %v783
        %v788 = vand.u32 2147483647, %v752
        %vm789 = vcmp.eq.f32.partialorder %v788, 8.507059e+37
        %v790 = vand.u32 %v752, 2147483648
        %v791 = vor.u32 1.1754944e-38, %v790
        %v792 = vsel %vm789, %v791, %v787
        %v793 = vmul.f32 %v777, %v792
        %794 = vrot.lane.b32.xlu0 %v245, 100
        %v795 = vpop.permute.xlu0 %794
        %796 = vrot.lane.b32.xlu0 %v245, 68
        %v797 = vpop.permute.xlu0 %796
        %v798 = vsel %vm250, %v795, 0
        %v800 = vsel %vm250, %v797, 0
        %802 = vmatpush.xpose.msra.mxu0 0.0
        %803 = vmatpush.xpose.msra.mxu0 0.0
        %804 = vmatpush.xpose.msra.mxu0 0.0
        %805 = vmatpush.xpose.msra.mxu0 0.0
        %806 = vmatpush.xpose.msra.mxu0 0.0
        %807 = vmatpush.xpose.msra.mxu0 0.0
        %808 = vmatpush.xpose.msra.mxu0 0.0
        %809 = vmatpush.xpose.msra.mxu0 0.0
        %810 = vmatpush.xpose.msra.mxu0 0.0
        %811 = vmatpush.xpose.msra.mxu0 0.0
        %812 = vmatpush.xpose.msra.mxu0 0.0
        %813 = vmatpush.xpose.msra.mxu0 0.0
        %814 = vmatpush.xpose.msra.mxu0 0.0
        %815 = vmatpush.xpose.msra.mxu0 0.0
        %816 = vmatpush.xpose.msra.mxu0 0.0
        %817 = vmatpush.xpose.msra.mxu0 %v800
        %818 = vmatmul.f32.gmra.mxu0 %v798
        %v819 = vpop.f32.mrf.mxu0
        %v820 = vadd.f32 0.0, %v819
        %821 = vdwg.mxu0
        %v822 = vsel %vm275, %v820, -inf
        %823 = vmax.xlane.f32.xlu0 %v822
        %v824 = vpop.xlane.xlu0 %823
        %v825 = vsub.f32 %v820, %v824
        %v826 = vmul.f32 %v825, 1.442695
        %v827 = vpow.pop %v826
        %v828 = vsel %vm275, %v827, 0.0
        %829 = vadd.xlane.f32.xlu0 %v828
        %v830 = vpop.xlane.xlu0 %829
        %831 = vrot.lane.b32.xlu0 %v245, 36
        %v832 = vpop.permute.xlu0 %831
        %v835 = vsel %vm275, %v827, 0
        %837 = vmatpush.msra.mxu0 0.0
        %838 = vmatpush.msra.mxu0 0.0
        %839 = vmatpush.msra.mxu0 0.0
        %840 = vmatpush.msra.mxu0 0.0
        %841 = vmatpush.msra.mxu0 0.0
        %842 = vmatpush.msra.mxu0 0.0
        %843 = vmatpush.msra.mxu0 0.0
        %844 = vmatpush.msra.mxu0 0.0
        %845 = vmatpush.msra.mxu0 0.0
        %846 = vmatpush.msra.mxu0 0.0
        %847 = vmatpush.msra.mxu0 0.0
        %848 = vmatpush.msra.mxu0 0.0
        %849 = vmatpush.msra.mxu0 0.0
        %850 = vmatpush.msra.mxu0 0.0
        %851 = vmatpush.msra.mxu0 0.0
        %852 = vmatpush.msra.mxu0 %v832
        %853 = vmatmul.f32.gmra.mxu0 %v835
        %v854 = vpop.f32.mrf.mxu0
        %v855 = vadd.f32 0.0, %v854
        %856 = vdwg.mxu0
        %v857 = vrcp.pop %v830
        %v858 = vmul.f32 %v830, %v857
        %v859 = vsub.f32 1.0, %v858
        %v860 = vmul.f32 %v857, %v859
        %v861 = vadd.f32 %v857, %v860
        %vm862 = vweird.f32 %v830
        %vm863 = vweird.f32 %v857
        %vm864 = vmor %vm862, %vm863
        %v865 = vsel %vm864, %v857, %v861
        %v866 = vand.u32 2147483647, %v830
        %vm867 = vcmp.eq.f32.partialorder %v866, 8.507059e+37
        %v868 = vand.u32 %v830, 2147483648
        %v869 = vor.u32 1.1754944e-38, %v868
        %v870 = vsel %vm867, %v869, %v865
        %v871 = vmul.f32 %v855, %v870
        %873 = vrot.lane.b32.xlu0 %v403, 4
        %v874 = vpop.permute.xlu0 %873
        %877 = vrot.lane.b32.xlu0 %v481, 8
        %v878 = vpop.permute.xlu0 %877
        %881 = vrot.lane.b32.xlu0 %v559, 12
        %v882 = vpop.permute.xlu0 %881
        %885 = vrot.lane.b32.xlu0 %v637, 16
        %v886 = vpop.permute.xlu0 %885
        %889 = vrot.lane.b32.xlu0 %v715, 20
        %v890 = vpop.permute.xlu0 %889
        %893 = vrot.lane.b32.xlu0 %v793, 24
        %v894 = vpop.permute.xlu0 %893
        %897 = vrot.lane.b32.xlu0 %v871, 28
        %v898 = vpop.permute.xlu0 %897
        %v900 = vsel %vm250, %v325, %v874
        %v901 = vsel %vm275, %v900, %v878
        %vm902 = vcmask 97280
        %v903 = vsel %vm902, %v901, %v882
        %vm904 = vcmask 130048
        %v905 = vsel %vm904, %v903, %v886
        %vm906 = vcmask 162816
        %v907 = vsel %vm906, %v905, %v890
        %vm908 = vcmask 195584
        %v909 = vsel %vm908, %v907, %v894
        %vm910 = vcmask 228352
        %v911 = vsel %vm910, %v909, %v898
        %v912 = vld [vmem:[#allocation2] sm:$0xff]
        %v914 = vsel %vm223, %v911, 0
        %916 = vmatpush.msra.mxu0 0.0
        %917 = vmatpush.msra.mxu0 0.0
        %918 = vmatpush.msra.mxu0 0.0
        %919 = vmatpush.msra.mxu0 0.0
        %920 = vmatpush.msra.mxu0 0.0
        %921 = vmatpush.msra.mxu0 0.0
        %922 = vmatpush.msra.mxu0 0.0
        %923 = vmatpush.msra.mxu0 0.0
        %924 = vmatpush.msra.mxu0 0.0
        %925 = vmatpush.msra.mxu0 0.0
        %926 = vmatpush.msra.mxu0 0.0
        %927 = vmatpush.msra.mxu0 0.0
        %928 = vmatpush.msra.mxu0 %v222
        %929 = vmatpush.msra.mxu0 %v221
        %930 = vmatpush.msra.mxu0 %v220
        %931 = vmatpush.msra.mxu0 %v219
        %932 = vmatmul.f32.gmra.mxu0 %v914
        %v933 = vpop.f32.mrf.mxu0
        %v934 = vadd.f32 0.0, %v933
        %935 = vdwg.mxu0
        %v936 = vadd.f32 %v912, %v934
        %937 = vst.msk [vmem:[#allocation2] sm:$0xff] %vm223, %v936
        // Predicated region
        $region41: #{attention_forward.1} parent=35 // pred_check
          %p938 = pneg %p205
        $region42: #{attention_forward.1} parent=35 // pred_check_branch
          %940 = sbr.rel (%p938) target = $region44
        $region43: #{attention_forward.1} parent=35 // pred_region
          %v941 = vld [vmem:[#allocation2] sm:$0xff]
          %v942 = vld [vmem:[%s3] sm:$0x1]
          %v944 = vperm.slane %v942, 0
          %v946 = vadd.f32 %v941, %v944
          %947 = vst.msk [vmem:[%s200] sm:$0xff] %vm223, %v946
        $region44: #{attention_forward.1} parent=35 // pred_fallthru
          _
        %s948 = sand.u32 %s127, 1
        %s949 = scalar_lea.sflag [#allocation4], %s948
        %s950 = sand.u32 %s127, 1
        %s951 = smul.addr %s950, 8
        %s952 = scalar_lea.vmem [#allocation3], %s951
        // Predicated region
        $region45: #{attention_forward.1} parent=35 // pred_check
          %p953 = pneg %p137
        $region46: #{attention_forward.1} parent=35 // pred_check_branch
          %955 = sbr.rel (%p953) target = $region48
        $region47: #{attention_forward.1} parent=35 // pred_region
          %957 = vsyncadd %s949, 0
          %s958 = smul.addr %s22, 8
          %s959 = scalar_lea.hbm %s4, %s958
          %s961 = sshll.u32 %s952, 4
          %s962 = int_to_ptr.vmem [resolvable:$true] %s961
          %s963 = sshll.u32 %s959, 4
          %s964 = int_to_ptr.hbm [resolvable:$true] %s963
          %966 = dma.vmem_to_hbm [thread:$0]  %s962, 128, %s964, %s949
        $region48: #{attention_forward.1} parent=35 // pred_fallthru
          _
      $region36: #{attention_forward.1} parent=5 // pred_fallthru
        _
      %p967 = scmp.le.s32.totalorder 2, %s13
      // Predicated region
      $region49: #{attention_forward.1} parent=5 // pred_check
        %p968 = pneg %p967
      $region50: #{attention_forward.1} parent=5 // pred_check_branch
        %970 = sbr.rel (%p968) target = $region52
      $region51: #{attention_forward.1} parent=5 // pred_region
        %s971 = ssub.s32 %s13, 2
        // Predicated region
        $region53: #{attention_forward.1} parent=51 // pred_check
          %p972 = pneg %p143
        $region54: #{attention_forward.1} parent=51 // pred_check_branch
          %974 = sbr.rel (%p972) target = $region56
        $region55: #{attention_forward.1} parent=51 // pred_region
          %s975 = sand.u32 %s128, 1
          %s976 = scalar_lea.sflag [#allocation4], %s975
          %s977 = sand.u32 %s128, 1
          %s978 = smul.addr %s977, 8
          %s979 = scalar_lea.vmem [#allocation3], %s978
          %981 = dma.done %s976, 128
        $region56: #{attention_forward.1} parent=51 // pred_fallthru
          _
      $region52: #{attention_forward.1} parent=5 // pred_fallthru
        _
    $region6: #{attention_forward.1} parent=1 // loop_footer
      %s17 = sadd.s32 1, %s13
    $region7: #{attention_forward.1} parent=1 // loop_footer_branch
      %12 = sbr.rel target = $region3
    $region8: #{attention_forward.1} parent=1 // loop_exit
      _
    %982 = vsyncpa [#allocation4], 1
    %s983 = scalar_lea.sflag [#allocation4], 1
    %984 = vsyncpa %s983, 1

</llo_original>
